<compile_context>
chip_gen: v7x
topology: tpu7x:2x2x1
jax: 0.10.0
libtpu: 0.0.40
codegen_flags: <defaults>
</compile_context>

<pallas_src>
import jax
import jax.numpy as jnp
import numpy as np
from jax.experimental import pallas as pl
from jax.experimental.pallas import tpu as pltpu
from jax.scipy.linalg import block_diag


def _stable_sigmoid(z):
    # sigmoid(z) without exp overflow for strongly negative logits.
    e = jnp.exp(-jnp.abs(z))
    inv = 1.0 / (1.0 + e)
    return jnp.where(z >= 0, inv, e * inv)


def predictor_kernel(alpha_ref,        # SMEM (2,)     [alpha_T, alpha_S]
                     x_ref,            # (4B, 128)     [spec_T; spec_S; share_T; share_S]
                     w1_ref, b1_ref,   # (128, 384), (1, 384)   cols [T | S | shared]
                     w2_ref, b2_ref,   # (384, 192), (1, 192)   block-diagonal
                     w3_ref, b3_ref,   # (192,   3), (1,   3)   block-diagonal
                     out_ref):         # (B, 2)        [:,0]=y_T   [:,1]=y_S
    B = out_ref.shape[0]
    x = x_ref[...]                                                   # (4B, 128)

    # ---- layer 1: one lane-dense pass over all 3 branches, ReLU ----
    h1 = jnp.maximum(
        jnp.dot(x, w1_ref[...], preferred_element_type=jnp.float32)
        + b1_ref[...], 0.0)                                          # (4B, 384)

    # ---- layer 2: block-diagonal (off-branch cols never read downstream) ----
    h2 = jnp.maximum(
        jnp.dot(h1, w2_ref[...], preferred_element_type=jnp.float32)
        + b2_ref[...], 0.0)                                          # (4B, 192)

    # ---- layer 3: block-diagonal, stable sigmoid ----
    z = jnp.dot(h2, w3_ref[...],
                preferred_element_type=jnp.float32) + b3_ref[...]    # (4B, 3)
    y = _stable_sigmoid(z)

    y_spec_T = y[0:B, 0:1]              # col 0 <- W_T branch, spec_T rows
    y_spec_S = y[B:2 * B, 1:2]          # col 1 <- W_S branch, spec_S rows
    y_share_T = y[2 * B:3 * B, 2:3]     # col 2 <- shared branch, share_T rows
    y_share_S = y[3 * B:4 * B, 2:3]     # col 2 <- shared branch, share_S rows

    a_T = alpha_ref[0]
    a_S = alpha_ref[1]
    # blend written as spec + alpha*(share - spec) == alpha*share + (1-alpha)*spec
    out_ref[:, 0:1] = y_spec_T + a_T * (y_share_T - y_spec_T)
    out_ref[:, 1:2] = y_spec_S + a_S * (y_share_S - y_spec_S)


def init_mlp_params(key, d_in, hidden_dims):
    """Deterministic PyTorch-style (uniform +/- 1/sqrt(fan_in)) init.

    Weights stored as (in, out); biases as (1, out)."""
    dims = [d_in] + list(hidden_dims) + [1]
    params = []
    for i in range(len(dims) - 1):
        key, kw, kb = jax.random.split(key, 3)
        bound = 1.0 / np.sqrt(dims[i])
        W = jax.random.uniform(kw, (dims[i], dims[i + 1]), jnp.float32,
                               minval=-bound, maxval=bound)
        b = jax.random.uniform(kb, (1, dims[i + 1]), jnp.float32,
                               minval=-bound, maxval=bound)
        params += [W, b]
    return params, key


def pack_predictor_params(params_T, params_S, params_shared):
    """Pack the 18 per-branch tensors into 6 fused buffers. Call ONCE at init."""
    tW1, tb1, tW2, tb2, tW3, tb3 = params_T
    sW1, sb1, sW2, sb2, sW3, sb3 = params_S
    cW1, cb1, cW2, cb2, cW3, cb3 = params_shared

    w1_cat = jnp.concatenate([tW1, sW1, cW1], axis=1)    # (128, 384)
    b1_cat = jnp.concatenate([tb1, sb1, cb1], axis=1)    # (1, 384)
    w2_bd = block_diag(tW2, sW2, cW2)                    # (384, 192)
    b2_cat = jnp.concatenate([tb2, sb2, cb2], axis=1)    # (1, 192)
    w3_bd = block_diag(tW3, sW3, cW3)                    # (192, 3)
    b3_cat = jnp.concatenate([tb3, sb3, cb3], axis=1)    # (1, 3)

    return (w1_cat.astype(jnp.float32), b1_cat.astype(jnp.float32),
            w2_bd.astype(jnp.float32), b2_cat.astype(jnp.float32),
            w3_bd.astype(jnp.float32), b3_cat.astype(jnp.float32))


@jax.jit
def predictor_forward(h_specific_T, h_specific_S, h_share_T, h_share_S,
                      packed_params, alphas):
    """alphas = jnp.array([alpha_T, alpha_S], f32). packed_params from
    pack_predictor_params (built once, reused every call)."""
    w1_cat, b1_cat, w2_bd, b2_cat, w3_bd, b3_cat = packed_params
    B = h_specific_T.shape[0]

    x_pack = jnp.concatenate(
        [h_specific_T, h_specific_S, h_share_T, h_share_S], axis=0)  # (4B, 128)

    vmem = pl.BlockSpec(memory_space=pltpu.MemorySpace.VMEM)
    smem = pl.BlockSpec(memory_space=pltpu.MemorySpace.SMEM)

    y = pl.pallas_call(
        predictor_kernel,
        out_shape=jax.ShapeDtypeStruct((B, 2), jnp.float32),
        in_specs=[smem, vmem, vmem, vmem, vmem, vmem, vmem, vmem],
        out_specs=vmem,
    )(alphas, x_pack, w1_cat, b1_cat, w2_bd, b2_cat, w3_bd, b3_cat)

    return y[:, 0:1], y[:, 1:2]


def predictor_reference(h_specific_T, h_specific_S, h_share_T, h_share_S,
                        params_T, params_S, params_shared,
                        alpha_T=0.5, alpha_S=0.5):
    def mlp(x, p):
        w1, b1, w2, b2, w3, b3 = p
        h = jax.nn.relu(x @ w1 + b1)
        h = jax.nn.relu(h @ w2 + b2)
        return jax.nn.sigmoid(h @ w3 + b3)

    y_T = alpha_T * mlp(h_share_T, params_shared) + (1 - alpha_T) * mlp(h_specific_T, params_T)
    y_S = alpha_S * mlp(h_share_S, params_shared) + (1 - alpha_S) * mlp(h_specific_S, params_S)
    return y_T, y_S


if __name__ == "__main__":
    d_in = 128
    hidden_dims = [128, 64]
    B = 8

    key = jax.random.PRNGKey(0)
    key, k1, k2, k3, k4 = jax.random.split(key, 5)
    h_specific_T = jax.random.normal(k1, (B, d_in), jnp.float32)
    h_specific_S = jax.random.normal(k2, (B, d_in), jnp.float32)
    h_share_T = jax.random.normal(k3, (B, d_in), jnp.float32)
    h_share_S = jax.random.normal(k4, (B, d_in), jnp.float32)

    params_T, key = init_mlp_params(key, d_in, hidden_dims)
    params_S, key = init_mlp_params(key, d_in, hidden_dims)
    params_shared, key = init_mlp_params(key, d_in, hidden_dims)

    # Pack the static weights ONCE (hoisted out of the per-call path).
    packed_params = pack_predictor_params(params_T, params_S, params_shared)
    packed_params = jax.block_until_ready(packed_params)

    alphas = jnp.array([0.5, 0.5], dtype=jnp.float32)
    y_T, y_S = predictor_forward(h_specific_T, h_specific_S, h_share_T, h_share_S,
                                 packed_params, alphas)
    jax.block_until_ready((y_T, y_S))

    # correctness check against pure-JAX reference
    y_T_ref, y_S_ref = predictor_reference(h_specific_T, h_specific_S,
                                           h_share_T, h_share_S,
                                           params_T, params_S, params_shared,
                                           alpha_T=0.5, alpha_S=0.5)
    np.testing.assert_allclose(np.asarray(y_T), np.asarray(y_T_ref), rtol=1e-5, atol=1e-5)
    np.testing.assert_allclose(np.asarray(y_S), np.asarray(y_S_ref), rtol=1e-5, atol=1e-5)
    assert y_T.shape == (B, 1) and y_S.shape == (B, 1)

    # second call with different alphas reuses the same compiled kernel
    # (alphas are a runtime SMEM array, not a closure/trace constant)
    alphas2 = jnp.array([0.25, 0.75], dtype=jnp.float32)
    y_T2, y_S2 = predictor_forward(h_specific_T, h_specific_S, h_share_T, h_share_S,
                                   packed_params, alphas2)
    jax.block_until_ready((y_T2, y_S2))
    y_T2_ref, y_S2_ref = predictor_reference(h_specific_T, h_specific_S,
                                             h_share_T, h_share_S,
                                             params_T, params_S, params_shared,
                                             alpha_T=0.25, alpha_S=0.75)
    np.testing.assert_allclose(np.asarray(y_T2), np.asarray(y_T2_ref), rtol=1e-5, atol=1e-5)
    np.testing.assert_allclose(np.asarray(y_S2), np.asarray(y_S2_ref), rtol=1e-5, atol=1e-5)

    print("KERNEL_OK")
</pallas_src>

<mosaic_0001>
module attributes {stable_mosaic.version = 11 : i64} {
  func.func @predictor_kernel(%arg0: memref<2xf32, #tpu.memory_space<smem>>, %arg1: memref<32x128xf32, #tpu.memory_space<vmem>>, %arg2: memref<128x384xf32, #tpu.memory_space<vmem>>, %arg3: memref<1x384xf32, #tpu.memory_space<vmem>>, %arg4: memref<384x192xf32, #tpu.memory_space<vmem>>, %arg5: memref<1x192xf32, #tpu.memory_space<vmem>>, %arg6: memref<192x3xf32, #tpu.memory_space<vmem>>, %arg7: memref<1x3xf32, #tpu.memory_space<vmem>>, %arg8: memref<8x2xf32, #tpu.memory_space<vmem>>) attributes {dimension_semantics = [], scalar_prefetch = 0 : i64, scratch_operands = 0 : i64, tpu.core_type = #tpu.core_type<tc>} {
    %c0 = arith.constant 0 : index
    %c0_0 = arith.constant 0 : index
    %0 = vector.load %arg1[%c0, %c0_0] : memref<32x128xf32, #tpu.memory_space<vmem>>, vector<32x128xf32>
    %c0_1 = arith.constant 0 : index
    %c0_2 = arith.constant 0 : index
    %1 = vector.load %arg2[%c0_1, %c0_2] : memref<128x384xf32, #tpu.memory_space<vmem>>, vector<128x384xf32>
    %cst = arith.constant dense<0.000000e+00> : vector<32x384xf32>
    %2 = tpu.matmul %0, %1, %cst {dimension_numbers = #tpu.dot_dimension_numbers<[1], [0], [0], [1], [0, 0, 1, 1], [], []>} : vector<32x128xf32>, vector<128x384xf32>, vector<32x384xf32> -> vector<32x384xf32>
    %c0_3 = arith.constant 0 : index
    %c0_4 = arith.constant 0 : index
    %3 = vector.load %arg3[%c0_3, %c0_4] : memref<1x384xf32, #tpu.memory_space<vmem>>, vector<1x384xf32>
    %4 = vector.broadcast %3 : vector<1x384xf32> to vector<32x384xf32>
    %5 = arith.addf %2, %4 : vector<32x384xf32>
    %cst_5 = arith.constant 0.000000e+00 : f32
    %6 = vector.broadcast %cst_5 : f32 to vector<32x384xf32>
    %7 = arith.maximumf %5, %6 : vector<32x384xf32>
    %c0_6 = arith.constant 0 : index
    %c0_7 = arith.constant 0 : index
    %8 = vector.load %arg4[%c0_6, %c0_7] : memref<384x192xf32, #tpu.memory_space<vmem>>, vector<384x192xf32>
    %cst_8 = arith.constant dense<0.000000e+00> : vector<32x192xf32>
    %9 = tpu.matmul %7, %8, %cst_8 {dimension_numbers = #tpu.dot_dimension_numbers<[1], [0], [0], [1], [0, 0, 1, 1], [], []>} : vector<32x384xf32>, vector<384x192xf32>, vector<32x192xf32> -> vector<32x192xf32>
    %c0_9 = arith.constant 0 : index
    %c0_10 = arith.constant 0 : index
    %10 = vector.load %arg5[%c0_9, %c0_10] : memref<1x192xf32, #tpu.memory_space<vmem>>, vector<1x192xf32>
    %11 = vector.broadcast %10 : vector<1x192xf32> to vector<32x192xf32>
    %12 = arith.addf %9, %11 : vector<32x192xf32>
    %cst_11 = arith.constant 0.000000e+00 : f32
    %13 = vector.broadcast %cst_11 : f32 to vector<32x192xf32>
    %14 = arith.maximumf %12, %13 : vector<32x192xf32>
    %c0_12 = arith.constant 0 : index
    %c0_13 = arith.constant 0 : index
    %15 = vector.load %arg6[%c0_12, %c0_13] : memref<192x3xf32, #tpu.memory_space<vmem>>, vector<192x3xf32>
    %cst_14 = arith.constant dense<0.000000e+00> : vector<32x3xf32>
    %16 = tpu.matmul %14, %15, %cst_14 {dimension_numbers = #tpu.dot_dimension_numbers<[1], [0], [0], [1], [0, 0, 1, 1], [], []>} : vector<32x192xf32>, vector<192x3xf32>, vector<32x3xf32> -> vector<32x3xf32>
    %c0_15 = arith.constant 0 : index
    %c0_16 = arith.constant 0 : index
    %17 = vector.load %arg7[%c0_15, %c0_16] : memref<1x3xf32, #tpu.memory_space<vmem>>, vector<1x3xf32>
    %18 = vector.broadcast %17 : vector<1x3xf32> to vector<32x3xf32>
    %19 = arith.addf %16, %18 : vector<32x3xf32>
    %20 = math.absf %19 : vector<32x3xf32>
    %cst_17 = arith.constant 0.000000e+00 : f32
    %21 = vector.broadcast %cst_17 : f32 to vector<32x3xf32>
    %22 = arith.subf %21, %20 : vector<32x3xf32>
    %23 = math.exp %22 : vector<32x3xf32>
    %cst_18 = arith.constant 1.000000e+00 : f32
    %24 = vector.broadcast %cst_18 : f32 to vector<32x3xf32>
    %25 = arith.addf %24, %23 : vector<32x3xf32>
    %cst_19 = arith.constant 1.000000e+00 : f32
    %26 = vector.broadcast %cst_19 : f32 to vector<32x3xf32>
    %27 = arith.divf %26, %25 : vector<32x3xf32>
    %cst_20 = arith.constant 0.000000e+00 : f32
    %28 = vector.broadcast %cst_20 : f32 to vector<32x3xf32>
    %29 = arith.cmpf oge, %19, %28 : vector<32x3xf32>
    %30 = arith.mulf %23, %27 : vector<32x3xf32>
    %31 = arith.select %29, %27, %30 : vector<32x3xi1>, vector<32x3xf32>
    %32 = vector.extract_strided_slice %31 {offsets = [0, 0], sizes = [8, 1], strides = [1, 1]} : vector<32x3xf32> to vector<8x1xf32>
    %33 = vector.extract_strided_slice %31 {offsets = [8, 1], sizes = [8, 1], strides = [1, 1]} : vector<32x3xf32> to vector<8x1xf32>
    %34 = vector.extract_strided_slice %31 {offsets = [16, 2], sizes = [8, 1], strides = [1, 1]} : vector<32x3xf32> to vector<8x1xf32>
    %35 = vector.extract_strided_slice %31 {offsets = [24, 2], sizes = [8, 1], strides = [1, 1]} : vector<32x3xf32> to vector<8x1xf32>
    %c0_21 = arith.constant 0 : index
    %36 = memref.load %arg0[%c0_21] : memref<2xf32, #tpu.memory_space<smem>>
    %c1 = arith.constant 1 : index
    %37 = memref.load %arg0[%c1] : memref<2xf32, #tpu.memory_space<smem>>
    %38 = arith.subf %34, %32 : vector<8x1xf32>
    %39 = vector.broadcast %36 : f32 to vector<8x1xf32>
    %40 = arith.mulf %39, %38 : vector<8x1xf32>
    %41 = arith.addf %32, %40 : vector<8x1xf32>
    %c0_22 = arith.constant 0 : index
    %c0_23 = arith.constant 0 : index
    %42 = vector.load %arg8[%c0_22, %c0_23] : memref<8x2xf32, #tpu.memory_space<vmem>>, vector<8x1xf32>
    tpu.vector_store %arg8[%c0_22, %c0_23], %41 {strides = array<i32>} : memref<8x2xf32, #tpu.memory_space<vmem>>, vector<8x1xf32>,
    %43 = arith.subf %35, %33 : vector<8x1xf32>
    %44 = vector.broadcast %37 : f32 to vector<8x1xf32>
    %45 = arith.mulf %44, %43 : vector<8x1xf32>
    %46 = arith.addf %33, %45 : vector<8x1xf32>
    %c0_24 = arith.constant 0 : index
    %c1_25 = arith.constant 1 : index
    %47 = vector.load %arg8[%c0_24, %c1_25] : memref<8x2xf32, #tpu.memory_space<vmem>>, vector<8x1xf32>
    tpu.vector_store %arg8[%c0_24, %c1_25], %46 {strides = array<i32>} : memref<8x2xf32, #tpu.memory_space<vmem>>, vector<8x1xf32>,
    return
  }
}

</mosaic_0001>

<llo_original>
// kernel: predictor_forward.1
$region0: #{predictor_forward.1}
  #allocation0 [shape = 'u32[]', space=smem, size = 0x4, offset = 0x4, fixed_abs, tag = 'smem constant byte address 0x4 - core index']
  #allocation1 [shape = 'u32[144,128]{1,0:T(1,128)}', space=vmem, size = 0x12000, scoped, tag = 'internal scratch']
  %s0 = inlined_call_operand.vmem [shape: f32[2], index: 0, kind: input, shape index: {}]
  %s1 = inlined_call_operand.vmem [shape: f32[32,128], index: 1, kind: input, shape index: {}]
  %s2 = inlined_call_operand.vmem [shape: f32[128,384], index: 2, kind: input, shape index: {}]
  %s3 = inlined_call_operand.vmem [shape: f32[1,384], index: 3, kind: input, shape index: {}]
  %s4 = inlined_call_operand.vmem [shape: f32[384,192], index: 4, kind: input, shape index: {}]
  %s5 = inlined_call_operand.vmem [shape: f32[1,192], index: 5, kind: input, shape index: {}]
  %s6 = inlined_call_operand.vmem [shape: f32[192,3], index: 6, kind: input, shape index: {}]
  %s7 = inlined_call_operand.vmem [shape: f32[1,3], index: 7, kind: input, shape index: {}]
  %s8 = inlined_call_operand.vmem [shape: f32[8,2], index: 8, kind: output, shape index: {}]
  %s9 = sld [smem:[#allocation0]]
  $region46: #{predictor_forward.1} parent=0
    _
  %s11 = ssub.s32 1, %s9
  %s12 = scalar_select 0, %s11, %s9
  $region1: #{predictor_forward.1} parent=0
    #allocation2 [shape = 'u8[512]{0}', space=smem, size = 0x200, scoped, tag = 'input window, operand 0, single buffered']
    #allocation3 [shape = 's32[1]{0}', space=sflag, size = 0x4, scoped, tag = 'scoped memory for predictor_forward.1']
    %13 = vsyncpa [#allocation3], 0
    // Predicated region
    $region2: #{predictor_forward.1} parent=1 // pred_check
      _
    $region3: #{predictor_forward.1} parent=1 // pred_check_branch
      %15 = sbr.rel (0) target = $region5
    $region4: #{predictor_forward.1} parent=1 // pred_region
      %s17 = ssub.s32 16, 16
      %18 = vsyncadd [#allocation3], %s17
      %s20 = sshll.u32 %s0, 4
      %s21 = int_to_ptr.vmem [resolvable:$true] %s20
      %23 = dma.vmem_to_smem %s21, 16, [#allocation2], [#allocation3]
    $region5: #{predictor_forward.1} parent=1 // pred_fallthru
      _
    // Predicated region
    $region6: #{predictor_forward.1} parent=1 // pred_check
      _
    $region7: #{predictor_forward.1} parent=1 // pred_check_branch
      %25 = sbr.rel (0) target = $region9
    $region8: #{predictor_forward.1} parent=1 // pred_region
      _
    $region9: #{predictor_forward.1} parent=1 // pred_fallthru
      _
    // Predicated region
    $region10: #{predictor_forward.1} parent=1 // pred_check
      _
    $region11: #{predictor_forward.1} parent=1 // pred_check_branch
      %27 = sbr.rel (0) target = $region13
    $region12: #{predictor_forward.1} parent=1 // pred_region
      _
    $region13: #{predictor_forward.1} parent=1 // pred_fallthru
      _
    // Predicated region
    $region14: #{predictor_forward.1} parent=1 // pred_check
      _
    $region15: #{predictor_forward.1} parent=1 // pred_check_branch
      %29 = sbr.rel (0) target = $region17
    $region16: #{predictor_forward.1} parent=1 // pred_region
      _
    $region17: #{predictor_forward.1} parent=1 // pred_fallthru
      _
    // Predicated region
    $region18: #{predictor_forward.1} parent=1 // pred_check
      _
    $region19: #{predictor_forward.1} parent=1 // pred_check_branch
      %31 = sbr.rel (0) target = $region21
    $region20: #{predictor_forward.1} parent=1 // pred_region
      _
    $region21: #{predictor_forward.1} parent=1 // pred_fallthru
      _
    // Predicated region
    $region22: #{predictor_forward.1} parent=1 // pred_check
      _
    $region23: #{predictor_forward.1} parent=1 // pred_check_branch
      %33 = sbr.rel (0) target = $region25
    $region24: #{predictor_forward.1} parent=1 // pred_region
      _
    $region25: #{predictor_forward.1} parent=1 // pred_fallthru
      _
    // Predicated region
    $region26: #{predictor_forward.1} parent=1 // pred_check
      _
    $region27: #{predictor_forward.1} parent=1 // pred_check_branch
      %35 = sbr.rel (0) target = $region29
    $region28: #{predictor_forward.1} parent=1 // pred_region
      _
    $region29: #{predictor_forward.1} parent=1 // pred_fallthru
      _
    // Predicated region
    $region30: #{predictor_forward.1} parent=1 // pred_check
      _
    $region31: #{predictor_forward.1} parent=1 // pred_check_branch
      %37 = sbr.rel (0) target = $region33
    $region32: #{predictor_forward.1} parent=1 // pred_region
      _
    $region33: #{predictor_forward.1} parent=1 // pred_fallthru
      _
    // Predicated region
    $region34: #{predictor_forward.1} parent=1 // pred_check
      _
    $region35: #{predictor_forward.1} parent=1 // pred_check_branch
      %39 = sbr.rel (0) target = $region37
    $region36: #{predictor_forward.1} parent=1 // pred_region
      %40 = dma.done [#allocation3], 16
    $region37: #{predictor_forward.1} parent=1 // pred_fallthru
      _
    %41 = sfence
    %v42 = vld [vmem:[%s1] sm:$0xff]
    %v43 = vld [vmem:[%s1 + $0x8] sm:$0xff]
    %v44 = vld [vmem:[%s1 + $0x10] sm:$0xff]
    %v45 = vld [vmem:[%s1 + $0x18] sm:$0xff]
    %v46 = vld [vmem:[%s2] sm:$0xff]
    %v47 = vld [vmem:[%s2 + $0x8] sm:$0xff]
    %v48 = vld [vmem:[%s2 + $0x10] sm:$0xff]
    %v49 = vld [vmem:[%s2 + $0x18] sm:$0xff]
    %v50 = vld [vmem:[%s2 + $0x20] sm:$0xff]
    %v51 = vld [vmem:[%s2 + $0x28] sm:$0xff]
    %v52 = vld [vmem:[%s2 + $0x30] sm:$0xff]
    %v53 = vld [vmem:[%s2 + $0x38] sm:$0xff]
    %v54 = vld [vmem:[%s2 + $0x40] sm:$0xff]
    %v55 = vld [vmem:[%s2 + $0x48] sm:$0xff]
    %v56 = vld [vmem:[%s2 + $0x50] sm:$0xff]
    %v57 = vld [vmem:[%s2 + $0x58] sm:$0xff]
    %v58 = vld [vmem:[%s2 + $0x60] sm:$0xff]
    %v59 = vld [vmem:[%s2 + $0x68] sm:$0xff]
    %v60 = vld [vmem:[%s2 + $0x70] sm:$0xff]
    %v61 = vld [vmem:[%s2 + $0x78] sm:$0xff]
    %v62 = vld [vmem:[%s2 + $0x80] sm:$0xff]
    %v63 = vld [vmem:[%s2 + $0x88] sm:$0xff]
    %v64 = vld [vmem:[%s2 + $0x90] sm:$0xff]
    %v65 = vld [vmem:[%s2 + $0x98] sm:$0xff]
    %v66 = vld [vmem:[%s2 + $0xa0] sm:$0xff]
    %v67 = vld [vmem:[%s2 + $0xa8] sm:$0xff]
    %v68 = vld [vmem:[%s2 + $0xb0] sm:$0xff]
    %v69 = vld [vmem:[%s2 + $0xb8] sm:$0xff]
    %v70 = vld [vmem:[%s2 + $0xc0] sm:$0xff]
    %v71 = vld [vmem:[%s2 + $0xc8] sm:$0xff]
    %v72 = vld [vmem:[%s2 + $0xd0] sm:$0xff]
    %v73 = vld [vmem:[%s2 + $0xd8] sm:$0xff]
    %v74 = vld [vmem:[%s2 + $0xe0] sm:$0xff]
    %v75 = vld [vmem:[%s2 + $0xe8] sm:$0xff]
    %v76 = vld [vmem:[%s2 + $0xf0] sm:$0xff]
    %v77 = vld [vmem:[%s2 + $0xf8] sm:$0xff]
    %v78 = vld [vmem:[%s2 + $0x100] sm:$0xff]
    %v79 = vld [vmem:[%s2 + $0x108] sm:$0xff]
    %v80 = vld [vmem:[%s2 + $0x110] sm:$0xff]
    %v81 = vld [vmem:[%s2 + $0x118] sm:$0xff]
    %v82 = vld [vmem:[%s2 + $0x120] sm:$0xff]
    %v83 = vld [vmem:[%s2 + $0x128] sm:$0xff]
    %v84 = vld [vmem:[%s2 + $0x130] sm:$0xff]
    %v85 = vld [vmem:[%s2 + $0x138] sm:$0xff]
    %v86 = vld [vmem:[%s2 + $0x140] sm:$0xff]
    %v87 = vld [vmem:[%s2 + $0x148] sm:$0xff]
    %v88 = vld [vmem:[%s2 + $0x150] sm:$0xff]
    %v89 = vld [vmem:[%s2 + $0x158] sm:$0xff]
    %v90 = vld [vmem:[%s2 + $0x160] sm:$0xff]
    %v91 = vld [vmem:[%s2 + $0x168] sm:$0xff]
    %v92 = vld [vmem:[%s2 + $0x170] sm:$0xff]
    %v93 = vld [vmem:[%s2 + $0x178] sm:$0xff]
    %v94 = vld [vmem:[%s3] sm:$0x7]
    %v96 = vlaneseq
    %v97 = vshrl.u32 %v96, 7
    %v98 = vsub.s32 0, %v97
    %v99 = vrot.slane %v94, %v98
    %v100 = vlaneseq
    %v101 = vshrl.u32 %v100, 7
    %v102 = vsub.s32 1, %v101
    %v103 = vrot.slane %v94, %v102
    %v104 = vlaneseq
    %v105 = vshrl.u32 %v104, 7
    %v106 = vsub.s32 2, %v105
    %v107 = vrot.slane %v94, %v106
    %111 = vmatprep.subr.mxu0 %v47
    %112 = vmatpush1.msra.mxu0 %v46
    %113 = vmatprep.subr.mxu0 %v50
    %114 = vmatpush1.msra.mxu0 %v49
    %115 = vmatprep.subr.mxu0 %v53
    %116 = vmatpush1.msra.mxu0 %v52
    %117 = vmatprep.subr.mxu0 %v56
    %118 = vmatpush1.msra.mxu0 %v55
    %119 = vmatprep.subr.mxu0 %v59
    %120 = vmatpush1.msra.mxu0 %v58
    %121 = vmatprep.subr.mxu0 %v62
    %122 = vmatpush1.msra.mxu0 %v61
    %123 = vmatprep.subr.mxu0 %v65
    %124 = vmatpush1.msra.mxu0 %v64
    %125 = vmatprep.subr.mxu0 %v68
    %126 = vmatpush1.msra.mxu0 %v67
    %127 = vmatprep.subr.mxu0 %v71
    %128 = vmatpush1.msra.mxu0 %v70
    %129 = vmatprep.subr.mxu0 %v74
    %130 = vmatpush1.msra.mxu0 %v73
    %131 = vmatprep.subr.mxu0 %v77
    %132 = vmatpush1.msra.mxu0 %v76
    %133 = vmatprep.subr.mxu0 %v80
    %134 = vmatpush1.msra.mxu0 %v79
    %135 = vmatprep.subr.mxu0 %v83
    %136 = vmatpush1.msra.mxu0 %v82
    %137 = vmatprep.subr.mxu0 %v86
    %138 = vmatpush1.msra.mxu0 %v85
    %139 = vmatprep.subr.mxu0 %v89
    %140 = vmatpush1.msra.mxu0 %v88
    %141 = vmatprep.subr.mxu0 %v92
    %142 = vmatpush1.msra.mxu0 %v91
    %143 = vmatprep.subr.mxu0 0.0
    %144 = vmatpush1.msra.mxu0 0.0
    %145 = vmatprep.subr.mxu0 0.0
    %146 = vmatpush1.msra.mxu0 0.0
    %147 = vmatprep.subr.mxu0 0.0
    %148 = vmatpush1.msra.mxu0 0.0
    %149 = vmatprep.subr.mxu0 0.0
    %150 = vmatpush1.msra.mxu0 0.0
    %151 = vmatprep.subr.mxu0 0.0
    %152 = vmatpush1.msra.mxu0 0.0
    %153 = vmatprep.subr.mxu0 0.0
    %154 = vmatpush1.msra.mxu0 0.0
    %155 = vmatprep.subr.mxu0 0.0
    %156 = vmatpush1.msra.mxu0 0.0
    %157 = vmatprep.subr.mxu0 0.0
    %158 = vmatpush1.msra.mxu0 0.0
    %159 = vmatprep.subr.mxu0 0.0
    %160 = vmatpush1.msra.mxu0 0.0
    %161 = vmatprep.subr.mxu0 0.0
    %162 = vmatpush1.msra.mxu0 0.0
    %163 = vmatprep.subr.mxu0 0.0
    %164 = vmatpush1.msra.mxu0 0.0
    %165 = vmatprep.subr.mxu0 0.0
    %166 = vmatpush1.msra.mxu0 0.0
    %167 = vmatprep.subr.mxu0 0.0
    %168 = vmatpush1.msra.mxu0 0.0
    %169 = vmatprep.subr.mxu0 0.0
    %170 = vmatpush1.msra.mxu0 0.0
    %171 = vmatprep.subr.mxu0 0.0
    %172 = vmatpush1.msra.mxu0 0.0
    %173 = vmatprep.subr.mxu0 0.0
    %174 = vmatpush1.msra.mxu0 0.0
    %175 = vmatprep.mubr.f32.mxu0 0.0
    %176 = vmatmul.mubr.f32.gmra.mrb[0].mxu0 %v42
    %v177 = vpop.f32.mrb[0].mxu0
    %v178 = vadd.f32 %v99, %v177
    %v179 = vpop.f32.mrb[0].mxu0
    %v180 = vadd.f32 %v103, %v179
    %181 = vmatprep.mubr.f32.mxu0 0.0
    %182 = vmatmul.mubr.f32.gmra.mrb[0].mxu0 %v43
    %v183 = vpop.f32.mrb[0].mxu0
    %v184 = vadd.f32 %v99, %v183
    %v185 = vpop.f32.mrb[0].mxu0
    %v186 = vadd.f32 %v103, %v185
    %187 = vmatprep.mubr.f32.mxu0 0.0
    %188 = vmatmul.mubr.f32.gmra.mrb[0].mxu0 %v44
    %v189 = vpop.f32.mrb[0].mxu0
    %v190 = vadd.f32 %v99, %v189
    %v191 = vpop.f32.mrb[0].mxu0
    %v192 = vadd.f32 %v103, %v191
    %193 = vmatprep.mubr.f32.mxu0 0.0
    %194 = vmatmul.mubr.f32.gmra.mrb[0].mxu0 %v45
    %v195 = vpop.f32.mrb[0].mxu0
    %v196 = vadd.f32 %v99, %v195
    %v197 = vpop.f32.mrb[0].mxu0
    %v198 = vadd.f32 %v103, %v197
    %199 = vdwg.mxu0
    %200 = vmatprep.subr.mxu0 0.0
    %201 = vmatpush1.msra.mxu0 %v48
    %202 = vmatprep.subr.mxu0 0.0
    %203 = vmatpush1.msra.mxu0 %v51
    %204 = vmatprep.subr.mxu0 0.0
    %205 = vmatpush1.msra.mxu0 %v54
    %206 = vmatprep.subr.mxu0 0.0
    %207 = vmatpush1.msra.mxu0 %v57
    %208 = vmatprep.subr.mxu0 0.0
    %209 = vmatpush1.msra.mxu0 %v60
    %210 = vmatprep.subr.mxu0 0.0
    %211 = vmatpush1.msra.mxu0 %v63
    %212 = vmatprep.subr.mxu0 0.0
    %213 = vmatpush1.msra.mxu0 %v66
    %214 = vmatprep.subr.mxu0 0.0
    %215 = vmatpush1.msra.mxu0 %v69
    %216 = vmatprep.subr.mxu0 0.0
    %217 = vmatpush1.msra.mxu0 %v72
    %218 = vmatprep.subr.mxu0 0.0
    %219 = vmatpush1.msra.mxu0 %v75
    %220 = vmatprep.subr.mxu0 0.0
    %221 = vmatpush1.msra.mxu0 %v78
    %222 = vmatprep.subr.mxu0 0.0
    %223 = vmatpush1.msra.mxu0 %v81
    %224 = vmatprep.subr.mxu0 0.0
    %225 = vmatpush1.msra.mxu0 %v84
    %226 = vmatprep.subr.mxu0 0.0
    %227 = vmatpush1.msra.mxu0 %v87
    %228 = vmatprep.subr.mxu0 0.0
    %229 = vmatpush1.msra.mxu0 %v90
    %230 = vmatprep.subr.mxu0 0.0
    %231 = vmatpush1.msra.mxu0 %v93
    %232 = vmatprep.subr.mxu0 0.0
    %233 = vmatpush1.msra.mxu0 0.0
    %234 = vmatprep.subr.mxu0 0.0
    %235 = vmatpush1.msra.mxu0 0.0
    %236 = vmatprep.subr.mxu0 0.0
    %237 = vmatpush1.msra.mxu0 0.0
    %238 = vmatprep.subr.mxu0 0.0
    %239 = vmatpush1.msra.mxu0 0.0
    %240 = vmatprep.subr.mxu0 0.0
    %241 = vmatpush1.msra.mxu0 0.0
    %242 = vmatprep.subr.mxu0 0.0
    %243 = vmatpush1.msra.mxu0 0.0
    %244 = vmatprep.subr.mxu0 0.0
    %245 = vmatpush1.msra.mxu0 0.0
    %246 = vmatprep.subr.mxu0 0.0
    %247 = vmatpush1.msra.mxu0 0.0
    %248 = vmatprep.subr.mxu0 0.0
    %249 = vmatpush1.msra.mxu0 0.0
    %250 = vmatprep.subr.mxu0 0.0
    %251 = vmatpush1.msra.mxu0 0.0
    %252 = vmatprep.subr.mxu0 0.0
    %253 = vmatpush1.msra.mxu0 0.0
    %254 = vmatprep.subr.mxu0 0.0
    %255 = vmatpush1.msra.mxu0 0.0
    %256 = vmatprep.subr.mxu0 0.0
    %257 = vmatpush1.msra.mxu0 0.0
    %258 = vmatprep.subr.mxu0 0.0
    %259 = vmatpush1.msra.mxu0 0.0
    %260 = vmatprep.subr.mxu0 0.0
    %261 = vmatpush1.msra.mxu0 0.0
    %262 = vmatprep.subr.mxu0 0.0
    %263 = vmatpush1.msra.mxu0 0.0
    %264 = vmatprep.mubr.f32.mxu0 0.0
    %265 = vmatmul.mubr.f32.gmra.mrb[0].mxu0 %v42
    %v266 = vpop.f32.mrb[0].mxu0
    %v267 = vadd.f32 %v107, %v266
    %v268 = vpop.f32.mrb[0].mxu0
    %269 = vmatprep.mubr.f32.mxu0 0.0
    %270 = vmatmul.mubr.f32.gmra.mrb[0].mxu0 %v43
    %v271 = vpop.f32.mrb[0].mxu0
    %v272 = vadd.f32 %v107, %v271
    %v273 = vpop.f32.mrb[0].mxu0
    %274 = vmatprep.mubr.f32.mxu0 0.0
    %275 = vmatmul.mubr.f32.gmra.mrb[0].mxu0 %v44
    %v276 = vpop.f32.mrb[0].mxu0
    %v277 = vadd.f32 %v107, %v276
    %v278 = vpop.f32.mrb[0].mxu0
    %279 = vmatprep.mubr.f32.mxu0 0.0
    %280 = vmatmul.mubr.f32.gmra.mrb[0].mxu0 %v45
    %v281 = vpop.f32.mrb[0].mxu0
    %v282 = vadd.f32 %v107, %v281
    %v283 = vpop.f32.mrb[0].mxu0
    %284 = vdwg.mxu0
    %v285 = vmax.f32 %v178, 0.0
    %v286 = vmax.f32 %v180, 0.0
    %v287 = vmax.f32 %v267, 0.0
    %v288 = vmax.f32 %v184, 0.0
    %v289 = vmax.f32 %v186, 0.0
    %v290 = vmax.f32 %v272, 0.0
    %v291 = vmax.f32 %v190, 0.0
    %v292 = vmax.f32 %v192, 0.0
    %v293 = vmax.f32 %v277, 0.0
    %v294 = vmax.f32 %v196, 0.0
    %v295 = vmax.f32 %v198, 0.0
    %v296 = vmax.f32 %v282, 0.0
    %v297 = vld [vmem:[%s4] sm:$0xff]
    %v298 = vld [vmem:[%s4 + $0x8] sm:$0xff]
    %v299 = vld [vmem:[%s4 + $0x10] sm:$0xff]
    %v300 = vld [vmem:[%s4 + $0x18] sm:$0xff]
    %v301 = vld [vmem:[%s4 + $0x20] sm:$0xff]
    %v302 = vld [vmem:[%s4 + $0x28] sm:$0xff]
    %v303 = vld [vmem:[%s4 + $0x30] sm:$0xff]
    %v304 = vld [vmem:[%s4 + $0x38] sm:$0xff]
    %v305 = vld [vmem:[%s4 + $0x40] sm:$0xff]
    %v306 = vld [vmem:[%s4 + $0x48] sm:$0xff]
    %v307 = vld [vmem:[%s4 + $0x50] sm:$0xff]
    %v308 = vld [vmem:[%s4 + $0x58] sm:$0xff]
    %v309 = vld [vmem:[%s4 + $0x60] sm:$0xff]
    %v310 = vld [vmem:[%s4 + $0x68] sm:$0xff]
    %v311 = vld [vmem:[%s4 + $0x70] sm:$0xff]
    %v312 = vld [vmem:[%s4 + $0x78] sm:$0xff]
    %v313 = vld [vmem:[%s4 + $0x80] sm:$0xff]
    %v314 = vld [vmem:[%s4 + $0x88] sm:$0xff]
    %v315 = vld [vmem:[%s4 + $0x90] sm:$0xff]
    %v316 = vld [vmem:[%s4 + $0x98] sm:$0xff]
    %v317 = vld [vmem:[%s4 + $0xa0] sm:$0xff]
    %v318 = vld [vmem:[%s4 + $0xa8] sm:$0xff]
    %v319 = vld [vmem:[%s4 + $0xb0] sm:$0xff]
    %v320 = vld [vmem:[%s4 + $0xb8] sm:$0xff]
    %v321 = vld [vmem:[%s4 + $0xc0] sm:$0xff]
    %v322 = vld [vmem:[%s4 + $0xc8] sm:$0xff]
    %v323 = vld [vmem:[%s4 + $0xd0] sm:$0xff]
    %v324 = vld [vmem:[%s4 + $0xd8] sm:$0xff]
    %v325 = vld [vmem:[%s4 + $0xe0] sm:$0xff]
    %v326 = vld [vmem:[%s4 + $0xe8] sm:$0xff]
    %v327 = vld [vmem:[%s4 + $0xf0] sm:$0xff]
    %v328 = vld [vmem:[%s4 + $0xf8] sm:$0xff]
    %v329 = vld [vmem:[%s4 + $0x100] sm:$0xff]
    %v330 = vld [vmem:[%s4 + $0x108] sm:$0xff]
    %v331 = vld [vmem:[%s4 + $0x110] sm:$0xff]
    %v332 = vld [vmem:[%s4 + $0x118] sm:$0xff]
    %v333 = vld [vmem:[%s4 + $0x120] sm:$0xff]
    %v334 = vld [vmem:[%s4 + $0x128] sm:$0xff]
    %v335 = vld [vmem:[%s4 + $0x130] sm:$0xff]
    %v336 = vld [vmem:[%s4 + $0x138] sm:$0xff]
    %v337 = vld [vmem:[%s4 + $0x140] sm:$0xff]
    %v338 = vld [vmem:[%s4 + $0x148] sm:$0xff]
    %v339 = vld [vmem:[%s4 + $0x150] sm:$0xff]
    %v340 = vld [vmem:[%s4 + $0x158] sm:$0xff]
    %v341 = vld [vmem:[%s4 + $0x160] sm:$0xff]
    %v342 = vld [vmem:[%s4 + $0x168] sm:$0xff]
    %v343 = vld [vmem:[%s4 + $0x170] sm:$0xff]
    %v344 = vld [vmem:[%s4 + $0x178] sm:$0xff]
    %v345 = vld [vmem:[%s4 + $0x180] sm:$0xff]
    %v346 = vld [vmem:[%s4 + $0x188] sm:$0xff]
    %v347 = vld [vmem:[%s4 + $0x190] sm:$0xff]
    %v348 = vld [vmem:[%s4 + $0x198] sm:$0xff]
    %v349 = vld [vmem:[%s4 + $0x1a0] sm:$0xff]
    %v350 = vld [vmem:[%s4 + $0x1a8] sm:$0xff]
    %v351 = vld [vmem:[%s4 + $0x1b0] sm:$0xff]
    %v352 = vld [vmem:[%s4 + $0x1b8] sm:$0xff]
    %v353 = vld [vmem:[%s4 + $0x1c0] sm:$0xff]
    %v354 = vld [vmem:[%s4 + $0x1c8] sm:$0xff]
    %v355 = vld [vmem:[%s4 + $0x1d0] sm:$0xff]
    %v356 = vld [vmem:[%s4 + $0x1d8] sm:$0xff]
    %v357 = vld [vmem:[%s4 + $0x1e0] sm:$0xff]
    %v358 = vld [vmem:[%s4 + $0x1e8] sm:$0xff]
    %v359 = vld [vmem:[%s4 + $0x1f0] sm:$0xff]
    %v360 = vld [vmem:[%s4 + $0x1f8] sm:$0xff]
    %v361 = vld [vmem:[%s4 + $0x200] sm:$0xff]
    %v362 = vld [vmem:[%s4 + $0x208] sm:$0xff]
    %v363 = vld [vmem:[%s4 + $0x210] sm:$0xff]
    %v364 = vld [vmem:[%s4 + $0x218] sm:$0xff]
    %v365 = vld [vmem:[%s4 + $0x220] sm:$0xff]
    %v366 = vld [vmem:[%s4 + $0x228] sm:$0xff]
    %v367 = vld [vmem:[%s4 + $0x230] sm:$0xff]
    %v368 = vld [vmem:[%s4 + $0x238] sm:$0xff]
    %v369 = vld [vmem:[%s4 + $0x240] sm:$0xff]
    %v370 = vld [vmem:[%s4 + $0x248] sm:$0xff]
    %v371 = vld [vmem:[%s4 + $0x250] sm:$0xff]
    %v372 = vld [vmem:[%s4 + $0x258] sm:$0xff]
    %v373 = vld [vmem:[%s4 + $0x260] sm:$0xff]
    %v374 = vld [vmem:[%s4 + $0x268] sm:$0xff]
    %v375 = vld [vmem:[%s4 + $0x270] sm:$0xff]
    %v376 = vld [vmem:[%s4 + $0x278] sm:$0xff]
    %v377 = vld [vmem:[%s4 + $0x280] sm:$0xff]
    %v378 = vld [vmem:[%s4 + $0x288] sm:$0xff]
    %v379 = vld [vmem:[%s4 + $0x290] sm:$0xff]
    %v380 = vld [vmem:[%s4 + $0x298] sm:$0xff]
    %v381 = vld [vmem:[%s4 + $0x2a0] sm:$0xff]
    %v382 = vld [vmem:[%s4 + $0x2a8] sm:$0xff]
    %v383 = vld [vmem:[%s4 + $0x2b0] sm:$0xff]
    %v384 = vld [vmem:[%s4 + $0x2b8] sm:$0xff]
    %v385 = vld [vmem:[%s4 + $0x2c0] sm:$0xff]
    %v386 = vld [vmem:[%s4 + $0x2c8] sm:$0xff]
    %v387 = vld [vmem:[%s4 + $0x2d0] sm:$0xff]
    %v388 = vld [vmem:[%s4 + $0x2d8] sm:$0xff]
    %v389 = vld [vmem:[%s4 + $0x2e0] sm:$0xff]
    %v390 = vld [vmem:[%s4 + $0x2e8] sm:$0xff]
    %v391 = vld [vmem:[%s4 + $0x2f0] sm:$0xff]
    %v392 = vld [vmem:[%s4 + $0x2f8] sm:$0xff]
    %v393 = vld [vmem:[%s5] sm:$0x3]
    %v395 = vlaneseq
    %v396 = vshrl.u32 %v395, 7
    %v397 = vsub.s32 0, %v396
    %v398 = vrot.slane %v393, %v397
    %v399 = vlaneseq
    %v400 = vshrl.u32 %v399, 7
    %v401 = vsub.s32 1, %v400
    %v402 = vrot.slane %v393, %v401
    %405 = vmatprep.subr.mxu0 %v298
    %406 = vmatpush1.msra.mxu0 %v297
    %407 = vmatprep.subr.mxu0 %v300
    %408 = vmatpush1.msra.mxu0 %v299
    %409 = vmatprep.subr.mxu0 %v302
    %410 = vmatpush1.msra.mxu0 %v301
    %411 = vmatprep.subr.mxu0 %v304
    %412 = vmatpush1.msra.mxu0 %v303
    %413 = vmatprep.subr.mxu0 %v306
    %414 = vmatpush1.msra.mxu0 %v305
    %415 = vmatprep.subr.mxu0 %v308
    %416 = vmatpush1.msra.mxu0 %v307
    %417 = vmatprep.subr.mxu0 %v310
    %418 = vmatpush1.msra.mxu0 %v309
    %419 = vmatprep.subr.mxu0 %v312
    %420 = vmatpush1.msra.mxu0 %v311
    %421 = vmatprep.subr.mxu0 %v314
    %422 = vmatpush1.msra.mxu0 %v313
    %423 = vmatprep.subr.mxu0 %v316
    %424 = vmatpush1.msra.mxu0 %v315
    %425 = vmatprep.subr.mxu0 %v318
    %426 = vmatpush1.msra.mxu0 %v317
    %427 = vmatprep.subr.mxu0 %v320
    %428 = vmatpush1.msra.mxu0 %v319
    %429 = vmatprep.subr.mxu0 %v322
    %430 = vmatpush1.msra.mxu0 %v321
    %431 = vmatprep.subr.mxu0 %v324
    %432 = vmatpush1.msra.mxu0 %v323
    %433 = vmatprep.subr.mxu0 %v326
    %434 = vmatpush1.msra.mxu0 %v325
    %435 = vmatprep.subr.mxu0 %v328
    %436 = vmatpush1.msra.mxu0 %v327
    %437 = vmatprep.subr.mxu0 %v330
    %438 = vmatpush1.msra.mxu0 %v329
    %439 = vmatprep.subr.mxu0 %v332
    %440 = vmatpush1.msra.mxu0 %v331
    %441 = vmatprep.subr.mxu0 %v334
    %442 = vmatpush1.msra.mxu0 %v333
    %443 = vmatprep.subr.mxu0 %v336
    %444 = vmatpush1.msra.mxu0 %v335
    %445 = vmatprep.subr.mxu0 %v338
    %446 = vmatpush1.msra.mxu0 %v337
    %447 = vmatprep.subr.mxu0 %v340
    %448 = vmatpush1.msra.mxu0 %v339
    %449 = vmatprep.subr.mxu0 %v342
    %450 = vmatpush1.msra.mxu0 %v341
    %451 = vmatprep.subr.mxu0 %v344
    %452 = vmatpush1.msra.mxu0 %v343
    %453 = vmatprep.subr.mxu0 %v346
    %454 = vmatpush1.msra.mxu0 %v345
    %455 = vmatprep.subr.mxu0 %v348
    %456 = vmatpush1.msra.mxu0 %v347
    %457 = vmatprep.subr.mxu0 %v350
    %458 = vmatpush1.msra.mxu0 %v349
    %459 = vmatprep.subr.mxu0 %v352
    %460 = vmatpush1.msra.mxu0 %v351
    %461 = vmatprep.subr.mxu0 %v354
    %462 = vmatpush1.msra.mxu0 %v353
    %463 = vmatprep.subr.mxu0 %v356
    %464 = vmatpush1.msra.mxu0 %v355
    %465 = vmatprep.subr.mxu0 %v358
    %466 = vmatpush1.msra.mxu0 %v357
    %467 = vmatprep.subr.mxu0 %v360
    %468 = vmatpush1.msra.mxu0 %v359
    %469 = vmatprep.mubr.f32.mxu0 %v286
    %470 = vmatmul.mubr.f32.gmra.mrb[0].mxu0 %v285
    %v471 = vpop.f32.mrb[0].mxu0
    %v472 = vadd.f32 %v398, %v471
    %v473 = vpop.f32.mrb[0].mxu0
    %v474 = vadd.f32 %v402, %v473
    %475 = vmatprep.mubr.f32.mxu0 %v289
    %476 = vmatmul.mubr.f32.gmra.mrb[0].mxu0 %v288
    %v477 = vpop.f32.mrb[0].mxu0
    %v478 = vadd.f32 %v398, %v477
    %v479 = vpop.f32.mrb[0].mxu0
    %v480 = vadd.f32 %v402, %v479
    %481 = vmatprep.mubr.f32.mxu0 %v292
    %482 = vmatmul.mubr.f32.gmra.mrb[0].mxu0 %v291
    %v483 = vpop.f32.mrb[0].mxu0
    %v484 = vadd.f32 %v398, %v483
    %v485 = vpop.f32.mrb[0].mxu0
    %v486 = vadd.f32 %v402, %v485
    %487 = vmatprep.mubr.f32.mxu0 %v295
    %488 = vmatmul.mubr.f32.gmra.mrb[0].mxu0 %v294
    %v489 = vpop.f32.mrb[0].mxu0
    %v490 = vadd.f32 %v398, %v489
    %v491 = vpop.f32.mrb[0].mxu0
    %v492 = vadd.f32 %v402, %v491
    %493 = vdwg.mxu0
    %494 = vmatprep.subr.mxu0 %v362
    %495 = vmatpush1.msra.mxu0 %v361
    %496 = vmatprep.subr.mxu0 %v364
    %497 = vmatpush1.msra.mxu0 %v363
    %498 = vmatprep.subr.mxu0 %v366
    %499 = vmatpush1.msra.mxu0 %v365
    %500 = vmatprep.subr.mxu0 %v368
    %501 = vmatpush1.msra.mxu0 %v367
    %502 = vmatprep.subr.mxu0 %v370
    %503 = vmatpush1.msra.mxu0 %v369
    %504 = vmatprep.subr.mxu0 %v372
    %505 = vmatpush1.msra.mxu0 %v371
    %506 = vmatprep.subr.mxu0 %v374
    %507 = vmatpush1.msra.mxu0 %v373
    %508 = vmatprep.subr.mxu0 %v376
    %509 = vmatpush1.msra.mxu0 %v375
    %510 = vmatprep.subr.mxu0 %v378
    %511 = vmatpush1.msra.mxu0 %v377
    %512 = vmatprep.subr.mxu0 %v380
    %513 = vmatpush1.msra.mxu0 %v379
    %514 = vmatprep.subr.mxu0 %v382
    %515 = vmatpush1.msra.mxu0 %v381
    %516 = vmatprep.subr.mxu0 %v384
    %517 = vmatpush1.msra.mxu0 %v383
    %518 = vmatprep.subr.mxu0 %v386
    %519 = vmatpush1.msra.mxu0 %v385
    %520 = vmatprep.subr.mxu0 %v388
    %521 = vmatpush1.msra.mxu0 %v387
    %522 = vmatprep.subr.mxu0 %v390
    %523 = vmatpush1.msra.mxu0 %v389
    %524 = vmatprep.subr.mxu0 %v392
    %525 = vmatpush1.msra.mxu0 %v391
    %526 = vmatprep.subr.mxu0 0.0
    %527 = vmatpush1.msra.mxu0 0.0
    %528 = vmatprep.subr.mxu0 0.0
    %529 = vmatpush1.msra.mxu0 0.0
    %530 = vmatprep.subr.mxu0 0.0
    %531 = vmatpush1.msra.mxu0 0.0
    %532 = vmatprep.subr.mxu0 0.0
    %533 = vmatpush1.msra.mxu0 0.0
    %534 = vmatprep.subr.mxu0 0.0
    %535 = vmatpush1.msra.mxu0 0.0
    %536 = vmatprep.subr.mxu0 0.0
    %537 = vmatpush1.msra.mxu0 0.0
    %538 = vmatprep.subr.mxu0 0.0
    %539 = vmatpush1.msra.mxu0 0.0
    %540 = vmatprep.subr.mxu0 0.0
    %541 = vmatpush1.msra.mxu0 0.0
    %542 = vmatprep.subr.mxu0 0.0
    %543 = vmatpush1.msra.mxu0 0.0
    %544 = vmatprep.subr.mxu0 0.0
    %545 = vmatpush1.msra.mxu0 0.0
    %546 = vmatprep.subr.mxu0 0.0
    %547 = vmatpush1.msra.mxu0 0.0
    %548 = vmatprep.subr.mxu0 0.0
    %549 = vmatpush1.msra.mxu0 0.0
    %550 = vmatprep.subr.mxu0 0.0
    %551 = vmatpush1.msra.mxu0 0.0
    %552 = vmatprep.subr.mxu0 0.0
    %553 = vmatpush1.msra.mxu0 0.0
    %554 = vmatprep.subr.mxu0 0.0
    %555 = vmatpush1.msra.mxu0 0.0
    %556 = vmatprep.subr.mxu0 0.0
    %557 = vmatpush1.msra.mxu0 0.0
    %558 = vmatprep.mubr.f32.mxu0 0.0
    %559 = vmatmul.mubr.f32.gmra.mrb[0].mxu0 %v287
    %v560 = vpop.f32.mrb[0].mxu0
    %v561 = vadd.f32 %v472, %v560
    %v562 = vpop.f32.mrb[0].mxu0
    %v563 = vadd.f32 %v474, %v562
    %564 = vmatprep.mubr.f32.mxu0 0.0
    %565 = vmatmul.mubr.f32.gmra.mrb[0].mxu0 %v290
    %v566 = vpop.f32.mrb[0].mxu0
    %v567 = vadd.f32 %v478, %v566
    %v568 = vpop.f32.mrb[0].mxu0
    %v569 = vadd.f32 %v480, %v568
    %570 = vmatprep.mubr.f32.mxu0 0.0
    %571 = vmatmul.mubr.f32.gmra.mrb[0].mxu0 %v293
    %v572 = vpop.f32.mrb[0].mxu0
    %v573 = vadd.f32 %v484, %v572
    %v574 = vpop.f32.mrb[0].mxu0
    %v575 = vadd.f32 %v486, %v574
    %576 = vmatprep.mubr.f32.mxu0 0.0
    %577 = vmatmul.mubr.f32.gmra.mrb[0].mxu0 %v296
    %v578 = vpop.f32.mrb[0].mxu0
    %v579 = vadd.f32 %v490, %v578
    %v580 = vpop.f32.mrb[0].mxu0
    %v581 = vadd.f32 %v492, %v580
    %582 = vdwg.mxu0
    %v583 = vmax.f32 %v561, 0.0
    %v584 = vmax.f32 %v563, 0.0
    %v585 = vmax.f32 %v567, 0.0
    %v586 = vmax.f32 %v569, 0.0
    %v587 = vmax.f32 %v573, 0.0
    %v588 = vmax.f32 %v575, 0.0
    %v589 = vmax.f32 %v579, 0.0
    %v590 = vmax.f32 %v581, 0.0
    %v591 = vld [vmem:[%s6] sm:$0xff]
    %v592 = vld [vmem:[%s6 + $0x8] sm:$0xff]
    %v593 = vld [vmem:[%s6 + $0x10] sm:$0xff]
    %v594 = vld [vmem:[%s6 + $0x18] sm:$0xff]
    %v595 = vld [vmem:[%s6 + $0x20] sm:$0xff]
    %v596 = vld [vmem:[%s6 + $0x28] sm:$0xff]
    %v597 = vld [vmem:[%s6 + $0x30] sm:$0xff]
    %v598 = vld [vmem:[%s6 + $0x38] sm:$0xff]
    %v599 = vld [vmem:[%s6 + $0x40] sm:$0xff]
    %v600 = vld [vmem:[%s6 + $0x48] sm:$0xff]
    %v601 = vld [vmem:[%s6 + $0x50] sm:$0xff]
    %v602 = vld [vmem:[%s6 + $0x58] sm:$0xff]
    %v603 = vld [vmem:[%s6 + $0x60] sm:$0xff]
    %v604 = vld [vmem:[%s6 + $0x68] sm:$0xff]
    %v605 = vld [vmem:[%s6 + $0x70] sm:$0xff]
    %v606 = vld [vmem:[%s6 + $0x78] sm:$0xff]
    %v607 = vld [vmem:[%s6 + $0x80] sm:$0xff]
    %v608 = vld [vmem:[%s6 + $0x88] sm:$0xff]
    %v609 = vld [vmem:[%s6 + $0x90] sm:$0xff]
    %v610 = vld [vmem:[%s6 + $0x98] sm:$0xff]
    %v611 = vld [vmem:[%s6 + $0xa0] sm:$0xff]
    %v612 = vld [vmem:[%s6 + $0xa8] sm:$0xff]
    %v613 = vld [vmem:[%s6 + $0xb0] sm:$0xff]
    %v614 = vld [vmem:[%s6 + $0xb8] sm:$0xff]
    %v615 = vld [vmem:[%s7] sm:$0x1]
    %v617 = vlaneseq
    %v618 = vshrl.u32 %v617, 7
    %v619 = vsub.s32 0, %v618
    %v620 = vrot.slane %v615, %v619
    %vm622 = vcmask 523264
    %v624 = vsel %vm622, %v584, 0
    %v627 = vsel %vm622, %v586, 0
    %v630 = vsel %vm622, %v588, 0
    %v633 = vsel %vm622, %v590, 0
    %635 = vmatprep.subr.mxu0 0.0
    %636 = vmatpush1.msra.mxu0 %v591
    %637 = vmatprep.subr.mxu0 0.0
    %638 = vmatpush1.msra.mxu0 %v592
    %639 = vmatprep.subr.mxu0 0.0
    %640 = vmatpush1.msra.mxu0 %v593
    %641 = vmatprep.subr.mxu0 0.0
    %642 = vmatpush1.msra.mxu0 %v594
    %643 = vmatprep.subr.mxu0 0.0
    %644 = vmatpush1.msra.mxu0 %v595
    %645 = vmatprep.subr.mxu0 0.0
    %646 = vmatpush1.msra.mxu0 %v596
    %647 = vmatprep.subr.mxu0 0.0
    %648 = vmatpush1.msra.mxu0 %v597
    %649 = vmatprep.subr.mxu0 0.0
    %650 = vmatpush1.msra.mxu0 %v598
    %651 = vmatprep.subr.mxu0 0.0
    %652 = vmatpush1.msra.mxu0 %v599
    %653 = vmatprep.subr.mxu0 0.0
    %654 = vmatpush1.msra.mxu0 %v600
    %655 = vmatprep.subr.mxu0 0.0
    %656 = vmatpush1.msra.mxu0 %v601
    %657 = vmatprep.subr.mxu0 0.0
    %658 = vmatpush1.msra.mxu0 %v602
    %659 = vmatprep.subr.mxu0 0.0
    %660 = vmatpush1.msra.mxu0 %v603
    %661 = vmatprep.subr.mxu0 0.0
    %662 = vmatpush1.msra.mxu0 %v604
    %663 = vmatprep.subr.mxu0 0.0
    %664 = vmatpush1.msra.mxu0 %v605
    %665 = vmatprep.subr.mxu0 0.0
    %666 = vmatpush1.msra.mxu0 %v606
    %667 = vmatprep.subr.mxu0 0.0
    %668 = vmatpush1.msra.mxu0 %v607
    %669 = vmatprep.subr.mxu0 0.0
    %670 = vmatpush1.msra.mxu0 %v608
    %671 = vmatprep.subr.mxu0 0.0
    %672 = vmatpush1.msra.mxu0 %v609
    %673 = vmatprep.subr.mxu0 0.0
    %674 = vmatpush1.msra.mxu0 %v610
    %675 = vmatprep.subr.mxu0 0.0
    %676 = vmatpush1.msra.mxu0 %v611
    %677 = vmatprep.subr.mxu0 0.0
    %678 = vmatpush1.msra.mxu0 %v612
    %679 = vmatprep.subr.mxu0 0.0
    %680 = vmatpush1.msra.mxu0 %v613
    %681 = vmatprep.subr.mxu0 0.0
    %682 = vmatpush1.msra.mxu0 %v614
    %683 = vmatprep.subr.mxu0 0.0
    %684 = vmatpush1.msra.mxu0 0.0
    %685 = vmatprep.subr.mxu0 0.0
    %686 = vmatpush1.msra.mxu0 0.0
    %687 = vmatprep.subr.mxu0 0.0
    %688 = vmatpush1.msra.mxu0 0.0
    %689 = vmatprep.subr.mxu0 0.0
    %690 = vmatpush1.msra.mxu0 0.0
    %691 = vmatprep.subr.mxu0 0.0
    %692 = vmatpush1.msra.mxu0 0.0
    %693 = vmatprep.subr.mxu0 0.0
    %694 = vmatpush1.msra.mxu0 0.0
    %695 = vmatprep.subr.mxu0 0.0
    %696 = vmatpush1.msra.mxu0 0.0
    %697 = vmatprep.subr.mxu0 0.0
    %698 = vmatpush1.msra.mxu0 0.0
    %699 = vmatprep.mubr.f32.mxu0 %v624
    %700 = vmatmul.mubr.f32.gmra.mrb[0].mxu0 %v583
    %v701 = vpop.f32.mrb[0].mxu0
    %v702 = vadd.f32 %v620, %v701
    %v703 = vpop.f32.mrb[0].mxu0
    %704 = vmatprep.mubr.f32.mxu0 %v627
    %705 = vmatmul.mubr.f32.gmra.mrb[0].mxu0 %v585
    %v706 = vpop.f32.mrb[0].mxu0
    %v707 = vadd.f32 %v620, %v706
    %v708 = vpop.f32.mrb[0].mxu0
    %709 = vmatprep.mubr.f32.mxu0 %v630
    %710 = vmatmul.mubr.f32.gmra.mrb[0].mxu0 %v587
    %v711 = vpop.f32.mrb[0].mxu0
    %v712 = vadd.f32 %v620, %v711
    %v713 = vpop.f32.mrb[0].mxu0
    %714 = vmatprep.mubr.f32.mxu0 %v633
    %715 = vmatmul.mubr.f32.gmra.mrb[0].mxu0 %v589
    %v716 = vpop.f32.mrb[0].mxu0
    %v717 = vadd.f32 %v620, %v716
    %v718 = vpop.f32.mrb[0].mxu0
    %719 = vdwg.mxu0
    %v720 = vand.u32 2147483647, %v702
    %v721 = vand.u32 2147483647, %v707
    %v722 = vand.u32 2147483647, %v712
    %v723 = vand.u32 2147483647, %v717
    %v724 = vsub.f32 0.0, %v720
    %v725 = vsub.f32 0.0, %v721
    %v726 = vsub.f32 0.0, %v722
    %v727 = vsub.f32 0.0, %v723
    %v728 = vmul.f32 %v724, 1.442695
    %v729 = vpow.pop %v728
    %v730 = vmul.f32 %v725, 1.442695
    %v731 = vpow.pop %v730
    %v732 = vmul.f32 %v726, 1.442695
    %v733 = vpow.pop %v732
    %v734 = vmul.f32 %v727, 1.442695
    %v735 = vpow.pop %v734
    %v736 = vadd.f32 %v729, 1.0
    %v737 = vadd.f32 %v731, 1.0
    %v738 = vadd.f32 %v733, 1.0
    %v739 = vadd.f32 %v735, 1.0
    %v740 = vrcp.pop %v736
    %v741 = vmul.f32 1.0, %v740
    %v742 = vrcp.pop %v737
    %v743 = vmul.f32 1.0, %v742
    %v744 = vrcp.pop %v738
    %v745 = vmul.f32 1.0, %v744
    %v746 = vrcp.pop %v739
    %v747 = vmul.f32 1.0, %v746
    %vm748 = vcmp.ge.f32.partialorder %v702, 0.0
    %vm749 = vcmp.ge.f32.partialorder %v707, 0.0
    %vm750 = vcmp.ge.f32.partialorder %v712, 0.0
    %vm751 = vcmp.ge.f32.partialorder %v717, 0.0
    %v752 = vmul.f32 %v729, %v741
    %v753 = vmul.f32 %v731, %v743
    %v754 = vmul.f32 %v733, %v745
    %v755 = vmul.f32 %v735, %v747
    %v756 = vsel %vm748, %v741, %v752
    %v757 = vsel %vm749, %v743, %v753
    %v758 = vsel %vm750, %v745, %v754
    %v759 = vsel %vm751, %v747, %v755
    %s760 = sld [smem:[#allocation2]]
    %s761 = sld [smem:[#allocation2 + $0x1]]
    %763 = vrot.lane.b32.xlu0 %v756, 2
    %v764 = vpop.permute.xlu0 %763
    %v766 = vsub.f32 %v758, %v764
    %v767 = vstv %s760
    %v768 = vmul.f32 %v767, %v766
    %770 = vrot.lane.b32.xlu0 %v768, 126
    %v771 = vpop.permute.xlu0 %770
    %v773 = vadd.f32 %v756, %v771
    %vm774 = vcmask 7168
    %775 = vst.msk [vmem:[%s8] sm:$0xff] %vm774, %v773
    %777 = vrot.lane.b32.xlu0 %v757, 1
    %v778 = vpop.permute.xlu0 %777
    %v780 = vsub.f32 %v759, %v778
    %v781 = vstv %s761
    %v782 = vmul.f32 %v781, %v780
    %784 = vrot.lane.b32.xlu0 %v782, 127
    %v785 = vpop.permute.xlu0 %784
    %v787 = vadd.f32 %v757, %v785
    %vm788 = vcmask 15368
    %789 = vst.msk [vmem:[%s8] sm:$0xff] %vm788, %v787
    // Predicated region
    $region38: #{predictor_forward.1} parent=1 // pred_check
      _
    $region39: #{predictor_forward.1} parent=1 // pred_check_branch
      %791 = sbr.rel (0) target = $region41
    $region40: #{predictor_forward.1} parent=1 // pred_region
      _
    $region41: #{predictor_forward.1} parent=1 // pred_fallthru
      _
    // Predicated region
    $region42: #{predictor_forward.1} parent=1 // pred_check
      _
    $region43: #{predictor_forward.1} parent=1 // pred_check_branch
      %793 = sbr.rel (0) target = $region45
    $region44: #{predictor_forward.1} parent=1 // pred_region
      _
    $region45: #{predictor_forward.1} parent=1 // pred_fallthru
      _
    %794 = vsyncpa [#allocation3], 1

</llo_original>
